<compile_context>
chip_gen: v7x
topology: tpu7x:2x2x1
jax: 0.10.0
libtpu: 0.0.40
codegen_flags: <defaults>
</compile_context>

<pallas_src>
import jax
import jax.numpy as jnp
from jax.experimental import pallas as pl
from jax.experimental.pallas import tpu as pltpu


def _conv_gelu_kernel(w_ref, x_ref, o_ref):
    # w_ref: (Cout, Cin)   x_ref: (Cin, tm)   o_ref: (Cout, tm)
    v1 = jnp.dot(w_ref[...], x_ref[...], preferred_element_type=jnp.float32)
    inner = (v1 + (v1 * v1 * v1) * 0.044715) * 0.7978845608028654
    o_ref[...] = ((v1 * 0.5) * (jnp.tanh(inner) + 1.0)).astype(o_ref.dtype)


def conv1x1_gelu(x_nchw, w_conv, *, groups, tm_max=8192):
    """1x1 grouped conv (stride=1, padding=1, no bias) + tanh-GELU chain.

    x_nchw : (N, Cin, H, W) float32
    w_conv : (Cout, Cin // groups) float32   (1x1 kernel squeezed)
    returns: (N, Cout, H+2, W+2) float32
    """
    n, cin, h, w = x_nchw.shape
    cout = w_conv.shape[0]
    cin_per = cin // groups
    cout_per = cout // groups

    # Block-diagonal dense (Cout, Cin) weight reproducing grouped-conv mixing
    # (single einsum, no per-group scatter loop). No sublane padding needed:
    # full-extent BlockSpec dims are legal for any size.
    w_g = w_conv.reshape(groups, cout_per, cin_per).astype(jnp.float32)
    eye = jnp.eye(groups, dtype=jnp.float32)
    w_bd = jnp.einsum('goc,gh->gohc', w_g, eye).reshape(cout, cin)

    # The padding=1 border of the output is exactly zero (bias=False and
    # tanh-GELU(0)==0), so exactly one of {input spatial pre-pad, output
    # post-pad} is needed. Let the cheaper (smaller-channel) tensor eat it.
    pre_pad = cin <= cout
    if pre_pad:
        x_sp = jnp.pad(x_nchw, ((0, 0), (0, 0), (1, 1), (1, 1)))
        m = (h + 2) * (w + 2)
        x_rows = x_sp.reshape(n, cin, m).astype(jnp.float32)
    else:
        m = h * w
        x_rows = x_nchw.reshape(n, cin, m).astype(jnp.float32)

    # --- lane-tile selection -------------------------------------------------
    # Keep the double-buffered per-step working set (input + output columns)
    # under ~12 MiB so the default scoped-VMEM limit is safe on every chip.
    budget = 12 * 1024 * 1024
    bytes_per_col = 2 * (cin + cout) * 4          # double-buffered in + out
    tm_fit = max(128, (budget // bytes_per_col) // 128 * 128)
    tm = min(tm_max, tm_fit)

    m_ru = -(-m // 128) * 128
    if m_ru <= tm:
        tm = m                                    # full-extent block (any size is legal)
        num_m = 1
    else:
        num_m = -(-m // tm)                       # ragged last block handled by Pallas

    # Megacore (v7x): make sure the "parallel" grid has >= 2 steps when possible.
    if n * num_m < 2 and m >= 256:
        tm = -(-((m + 1) // 2) // 128) * 128
        num_m = -(-m // tm)

    out_rows = pl.pallas_call(
        _conv_gelu_kernel,
        out_shape=jax.ShapeDtypeStruct((n, cout, m), jnp.float32),
        grid_spec=pltpu.PrefetchScalarGridSpec(
            num_scalar_prefetch=0,
            grid=(n, num_m),
            in_specs=[
                pl.BlockSpec((cout, cin), lambda b, i: (0, 0)),      # resident weight
                pl.BlockSpec((None, cin, tm), lambda b, i: (b, 0, i)),
            ],
            out_specs=pl.BlockSpec((None, cout, tm), lambda b, i: (b, 0, i)),
        ),
        compiler_params=pltpu.CompilerParams(
            dimension_semantics=("parallel", "parallel")),
    )(w_bd, x_rows)

    if pre_pad:
        # Kernel already produced the padded spatial extent; reshape is free.
        return out_rows.reshape(n, cout, h + 2, w + 2)
    # Cin > Cout: pad the (smaller) output instead of the input.
    out_inner = out_rows.reshape(n, cout, h, w)
    return jnp.pad(out_inner, ((0, 0), (0, 0), (1, 1), (1, 1)))


def _reference(x_nchw, w_conv, groups):
    n, cin, h, w = x_nchw.shape
    cout = w_conv.shape[0]
    cin_per = cin // groups
    cout_per = cout // groups
    x_pad = jnp.pad(x_nchw, ((0, 0), (0, 0), (1, 1), (1, 1)))
    outs = []
    for g in range(groups):
        xg = x_pad[:, g * cin_per:(g + 1) * cin_per]          # (N, cin_per, Hp, Wp)
        wg = w_conv[g * cout_per:(g + 1) * cout_per]          # (cout_per, cin_per)
        outs.append(jnp.einsum('nchw,oc->nohw', xg, wg,
                               precision=jax.lax.Precision.HIGHEST))
    v1 = jnp.concatenate(outs, axis=1)
    v2 = v1 * 0.5
    v7 = (v1 + (v1 * v1 * v1) * 0.044715) * 0.7978845608028654
    return v2 * (jnp.tanh(v7) + 1.0)


if __name__ == "__main__":
    key = jax.random.PRNGKey(0)

    def run_case(name, n, cin, cout, h, w, groups, k):
        k1, k2 = jax.random.split(k)
        x = jax.random.normal(k1, (n, cin, h, w), dtype=jnp.float32)
        wt = jax.random.normal(k2, (cout, cin // groups), dtype=jnp.float32) * 0.1
        out = conv1x1_gelu(x, wt, groups=groups)
        jax.block_until_ready(out)
        ref = _reference(x, wt, groups)
        assert out.shape == (n, cout, h + 2, w + 2), (name, out.shape)
        assert jnp.allclose(out, ref, atol=1e-5, rtol=1e-5), f"mismatch vs reference: {name}"

    keys = jax.random.split(key, 3)
    # Aligned channels, input pre-pad path (Cin <= Cout), batch gives 2 parallel steps.
    run_case("aligned", 2, 8, 8, 16, 16, 2, keys[0])
    # Unaligned channels (12 / 10, not multiples of 8), output post-pad path
    # (Cin > Cout), ragged spatial extent (H*W = 63).
    run_case("unaligned", 2, 12, 10, 7, 9, 2, keys[1])
    # N=1 with M large enough to trigger the >=2-tile megacore split and a
    # partial (masked) last lane tile.
    run_case("split", 1, 6, 8, 20, 30, 2, keys[2])

    print("KERNEL_OK")
</pallas_src>

<mosaic_0001>
module attributes {stable_mosaic.version = 11 : i64} {
  func.func @_conv_gelu_kernel(%arg0: i32, %arg1: i32, %arg2: memref<8x8xf32, #tpu.memory_space<vmem>>, %arg3: memref<1x8x324xf32, #tpu.memory_space<vmem>>, %arg4: memref<1x8x324xf32, #tpu.memory_space<vmem>>) attributes {dimension_semantics = [#tpu.dimension_semantics<parallel>, #tpu.dimension_semantics<parallel>], iteration_bounds = array<i64: 2, 1>, scalar_prefetch = 0 : i64, scratch_operands = 0 : i64, tpu.core_type = #tpu.core_type<tc>, window_params = [{pipeline_mode = #tpu.pipeline_mode<synchronous>, transform_indices = @transform_0, window_bounds = array<i64: 8, 8>}, {transform_indices = @transform_1, window_bounds = array<i64: 1, 8, 324>}, {transform_indices = @transform_2, window_bounds = array<i64: 1, 8, 324>}]} {
    %c0 = arith.constant 0 : index
    %c0_0 = arith.constant 0 : index
    %0 = vector.load %arg2[%c0, %c0_0] : memref<8x8xf32, #tpu.memory_space<vmem>>, vector<8x8xf32>
    %c0_1 = arith.constant 0 : index
    %c0_2 = arith.constant 0 : index
    %c0_3 = arith.constant 0 : index
    %1 = vector.load %arg3[%c0_1, %c0_2, %c0_3] : memref<1x8x324xf32, #tpu.memory_space<vmem>>, vector<1x8x324xf32>
    %2 = vector.shape_cast %1 : vector<1x8x324xf32> to vector<8x324xf32>
    %cst = arith.constant dense<0.000000e+00> : vector<8x324xf32>
    %3 = tpu.matmul %0, %2, %cst {dimension_numbers = #tpu.dot_dimension_numbers<[1], [0], [0], [1], [0, 0, 1, 1], [], []>} : vector<8x8xf32>, vector<8x324xf32>, vector<8x324xf32> -> vector<8x324xf32>
    %4 = arith.mulf %3, %3 : vector<8x324xf32>
    %5 = arith.mulf %4, %3 : vector<8x324xf32>
    %cst_4 = arith.constant 4.471500e-02 : f32
    %6 = vector.broadcast %cst_4 : f32 to vector<8x324xf32>
    %7 = arith.mulf %5, %6 : vector<8x324xf32>
    %8 = arith.addf %3, %7 : vector<8x324xf32>
    %cst_5 = arith.constant 0.797884583 : f32
    %9 = vector.broadcast %cst_5 : f32 to vector<8x324xf32>
    %10 = arith.mulf %8, %9 : vector<8x324xf32>
    %cst_6 = arith.constant 5.000000e-01 : f32
    %11 = vector.broadcast %cst_6 : f32 to vector<8x324xf32>
    %12 = arith.mulf %3, %11 : vector<8x324xf32>
    %13 = math.tanh %10 : vector<8x324xf32>
    %cst_7 = arith.constant 1.000000e+00 : f32
    %14 = vector.broadcast %cst_7 : f32 to vector<8x324xf32>
    %15 = arith.addf %13, %14 : vector<8x324xf32>
    %16 = arith.mulf %12, %15 : vector<8x324xf32>
    %c0_8 = arith.constant 0 : index
    %c0_9 = arith.constant 0 : index
    %c0_10 = arith.constant 0 : index
    %17 = vector.load %arg4[%c0_8, %c0_9, %c0_10] : memref<1x8x324xf32, #tpu.memory_space<vmem>>, vector<1x8x324xf32>
    %18 = vector.shape_cast %17 : vector<1x8x324xf32> to vector<8x324xf32>
    %19 = vector.shape_cast %16 : vector<8x324xf32> to vector<1x8x324xf32>
    tpu.vector_store %arg4[%c0_8, %c0_9, %c0_10], %19 {strides = array<i32>} : memref<1x8x324xf32, #tpu.memory_space<vmem>>, vector<1x8x324xf32>,
    return
  }
  func.func @transform_0(%arg0: i32, %arg1: i32) -> (i32, i32) {
    %c0_i32 = arith.constant 0 : i32
    %c0_i32_0 = arith.constant 0 : i32
    %c0_i32_1 = arith.constant 0 : i32
    return %c0_i32, %c0_i32_0 : i32, i32
  }
  func.func @transform_1(%arg0: i32, %arg1: i32) -> (i32, i32, i32) {
    %c0_i32 = arith.constant 0 : i32
    %c0_i32_0 = arith.constant 0 : i32
    return %arg0, %c0_i32, %arg1 : i32, i32, i32
  }
  func.func @transform_2(%arg0: i32, %arg1: i32) -> (i32, i32, i32) {
    %c0_i32 = arith.constant 0 : i32
    %c0_i32_0 = arith.constant 0 : i32
    return %arg0, %c0_i32, %arg1 : i32, i32, i32
  }
}

</mosaic_0001>

<llo_original>
// kernel: tpu_custom_call.1
$region0: #{tpu_custom_call.1}
  #allocation0 [shape = 'u32[]', space=smem, size = 0x4, offset = 0x4, fixed_abs, tag = 'smem constant byte address 0x4 - core index']
  #allocation1 [shape = 'u32[144,128]{1,0:T(1,128)}', space=vmem, size = 0x12000, scoped, tag = 'internal scratch']
  %s0 = inlined_call_operand.hbm [shape: f32[8,8], index: 0, kind: input, shape index: {}]
  %s1 = inlined_call_operand.hbm [shape: f32[2,8,324], index: 1, kind: input, shape index: {}]
  %s2 = inlined_call_operand.hbm [shape: f32[2,8,324], index: 2, kind: output, shape index: {}]
  %s3 = sld [smem:[#allocation0]]
  $region49: #{tpu_custom_call.1} parent=0
    _
  %s5 = ssub.s32 1, %s3
  %s6 = scalar_select 0, %s5, %s3
  $region1: #{tpu_custom_call.1} parent=0
    #allocation2 [shape = 'u8[4096]{0}', space=vmem, size = 0x1000, scoped, tag = 'input window, operand 0, single buffered']
    #allocation3 [shape = 's32[2]{0}', space=sflag, size = 0x8, scoped, tag = 'scoped memory for tpu_custom_call.1']
    #allocation4 [shape = 's32[2]{0}', space=sflag, size = 0x8, scoped, tag = 'scoped memory for tpu_custom_call.1']
    #allocation5 [shape = 'u8[24576]{0}', space=vmem, size = 0x6000, scoped, tag = 'input window, operand 1']
    #allocation6 [shape = 's32[2]{0}', space=sflag, size = 0x8, scoped, tag = 'scoped memory for tpu_custom_call.1']
    #allocation7 [shape = 'u8[24576]{0}', space=vmem, size = 0x6000, scoped, tag = 'output window, operand 0']
    %7 = vsyncpa [#allocation3], 0
    %8 = vsyncpa [#allocation6], 0
    %s9 = scalar_lea.sflag [#allocation6], 1
    %10 = vsyncpa %s9, 0
    %11 = vsyncpa [#allocation4], 0
    %s12 = scalar_lea.sflag [#allocation4], 1
    %13 = vsyncpa %s12, 0
    loop: start=0, step=1, limit=4
    $region2: #{tpu_custom_call.1} parent=1 // loop_pre_header
      _
    $region3: #{tpu_custom_call.1} parent=1 // loop_header
      %s15 = sphi 0, %s19
      %p16 = scmp.ge.s32.totalorder %s15, 4
      %s22 = sphi 0, %s34
      %s23 = sphi 0, %s30
      %s24 = sphi 0, %s22
      %s25 = sphi 0, %s23
      %s26 = sphi 0, %s24
      %s27 = sphi 0, %s25
      %s35 = sphi 0, %s35
      %s37 = sphi 0, %s35
      %s38 = sphi 0, %s37
      %s52 = sphi 0, %s38
      %s60 = sphi 0, %s62
      %s63 = sphi 0, %s60
      %s64 = sphi 0, %s63
      %s80 = sphi 0, %s64
      %s88 = sphi 0, %s90
      %s91 = sphi 0, %s88
      %s92 = sphi 0, %s91
      %s108 = sphi 0, %s92
    $region4: #{tpu_custom_call.1} parent=1 // loop_header_branch
      %18 = sbr.rel (%p16) target = $region8
    $region5: #{tpu_custom_call.1} parent=1 // loop_body
      %s20 = ssub.s32 %s15, 1
      %s21 = ssub.s32 %s15, 2
      %s28 = sadd.s32 1, %s23
      %p29 = scmp.ge.s32.totalorder %s28, 1
      %s30 = scalar_select %p29, 0, %s28
      %s31 = sadd.s32 1, %s22
      %s32 = scalar_select %p29, %s31, %s22
      %p33 = scmp.ge.s32.totalorder %s32, 2
      %s34 = scalar_select %p33, 0, %s32
      %s36 = sadd.s32 %s35, 1
      %p39 = scmp.eq.s32.totalorder %s15, 1
      %p40 = scmp.ne.s32.totalorder %s35, %s37
      %p41 = scmp.eq.s32.totalorder %s15, 0
      %p42 = por %p40, %p41
      %p43 = scmp.ne.s32.totalorder %s35, %s37
      %p44 = scmp.eq.s32.totalorder %s20, 1
      %p45 = por %p43, %p44
      %p46 = scmp.ne.s32.totalorder %s37, %s38
      %p47 = scmp.eq.s32.totalorder %s20, 0
      %p48 = por %p46, %p47
      %p49 = scmp.ne.s32.totalorder %s37, %s38
      %p50 = scmp.eq.s32.totalorder %s21, 1
      %p51 = por %p49, %p50
      %p53 = scmp.ne.s32.totalorder %s38, %s52
      %p54 = scmp.eq.s32.totalorder %s21, 0
      %p55 = por %p53, %p54
      %s56 = ssub.s32 %s22, %s34
      %s57 = ssub.s32 %s23, %s30
      %s58 = sor.u32 %s56, %s57
      %p59 = scmp.eq.s32.totalorder %s58, 0
      %s61 = sadd.s32 %s60, 1
      %s62 = scalar_select %p59, %s60, %s61
      %p65 = pneg %p59
      %p66 = scmp.eq.s32.totalorder %s15, 1
      %p67 = por %p65, %p66
      %p68 = scmp.ne.s32.totalorder %s60, %s63
      %p69 = scmp.eq.s32.totalorder %s15, 0
      %p70 = por %p68, %p69
      %p71 = scmp.ne.s32.totalorder %s60, %s63
      %p72 = scmp.eq.s32.totalorder %s20, 1
      %p73 = por %p71, %p72
      %p74 = scmp.ne.s32.totalorder %s63, %s64
      %p75 = scmp.eq.s32.totalorder %s20, 0
      %p76 = por %p74, %p75
      %p77 = scmp.ne.s32.totalorder %s63, %s64
      %p78 = scmp.eq.s32.totalorder %s21, 1
      %p79 = por %p77, %p78
      %p81 = scmp.ne.s32.totalorder %s64, %s80
      %p82 = scmp.eq.s32.totalorder %s21, 0
      %p83 = por %p81, %p82
      %s84 = ssub.s32 %s22, %s34
      %s85 = ssub.s32 %s23, %s30
      %s86 = sor.u32 %s84, %s85
      %p87 = scmp.eq.s32.totalorder %s86, 0
      %s89 = sadd.s32 %s88, 1
      %s90 = scalar_select %p87, %s88, %s89
      %p93 = pneg %p87
      %p94 = scmp.eq.s32.totalorder %s15, 1
      %p95 = por %p93, %p94
      %p96 = scmp.ne.s32.totalorder %s88, %s91
      %p97 = scmp.eq.s32.totalorder %s15, 0
      %p98 = por %p96, %p97
      %p99 = scmp.ne.s32.totalorder %s88, %s91
      %p100 = scmp.eq.s32.totalorder %s20, 1
      %p101 = por %p99, %p100
      %p102 = scmp.ne.s32.totalorder %s91, %s92
      %p103 = scmp.eq.s32.totalorder %s20, 0
      %p104 = por %p102, %p103
      %p105 = scmp.ne.s32.totalorder %s91, %s92
      %p106 = scmp.eq.s32.totalorder %s21, 1
      %p107 = por %p105, %p106
      %p109 = scmp.ne.s32.totalorder %s92, %s108
      %p110 = scmp.eq.s32.totalorder %s21, 0
      %p111 = por %p109, %p110
      %p112 = scmp.le.s32.totalorder 1, %s15
      %p113 = scmp.lt.s32.totalorder %s15, 3
      %p114 = pnand %p112, %p113
      %p115 = pneg %p114
      // Predicated region
      $region9: #{tpu_custom_call.1} parent=5 // pred_check
        _
      $region10: #{tpu_custom_call.1} parent=5 // pred_check_branch
        %117 = sbr.rel (%p114) target = $region12
      $region11: #{tpu_custom_call.1} parent=5 // pred_region
        %s118 = ssub.s32 %s15, 1
        // Predicated region
        $region13: #{tpu_custom_call.1} parent=11 // pred_check
          %p119 = pneg %p48
        $region14: #{tpu_custom_call.1} parent=11 // pred_check_branch
          %121 = sbr.rel (%p119) target = $region16
        $region15: #{tpu_custom_call.1} parent=11 // pred_region
          %s123 = ssub.s32 128, 128
          %124 = vsyncadd [#allocation3], %s123
          %s126 = sshll.u32 [#allocation2], 4
          %s127 = int_to_ptr.vmem [resolvable:$true] %s126
          %129 = dma.hbm_to_vmem [thread:$0]  %s0, 128, %s127, [#allocation3]
        $region16: #{tpu_custom_call.1} parent=11 // pred_fallthru
          _
      $region12: #{tpu_custom_call.1} parent=5 // pred_fallthru
        _
      %p130 = scmp.lt.s32.totalorder %s15, 2
      // Predicated region
      $region17: #{tpu_custom_call.1} parent=5 // pred_check
        %p131 = pneg %p130
      $region18: #{tpu_custom_call.1} parent=5 // pred_check_branch
        %133 = sbr.rel (%p131) target = $region20
      $region19: #{tpu_custom_call.1} parent=5 // pred_region
        // Predicated region
        $region21: #{tpu_custom_call.1} parent=19 // pred_check
          %p134 = pneg %p70
        $region22: #{tpu_custom_call.1} parent=19 // pred_check_branch
          %136 = sbr.rel (%p134) target = $region24
        $region23: #{tpu_custom_call.1} parent=19 // pred_region
          %s137 = sand.u32 %s60, 1
          %s138 = scalar_lea.sflag [#allocation6], %s137
          %s139 = sand.u32 %s60, 1
          %s140 = smul.addr %s139, 24
          %s141 = scalar_lea.vmem [#allocation5], %s140
          %s142 = smul.u32 3, %s23
          %s144 = ssub.s32 384, 384
          %145 = vsyncadd %s138, %s144
          %s146 = smul.addr %s22, 3
          %s147 = sadd.s32 %s142, %s146
          %s148 = smul.addr %s147, 128
          %s149 = scalar_lea.hbm %s1, %s148
          %s151 = sshll.u32 %s141, 4
          %s152 = int_to_ptr.vmem [resolvable:$true] %s151
          %154 = dma.hbm_to_vmem [thread:$0]  %s149, 384, %s152, %s138
        $region24: #{tpu_custom_call.1} parent=19 // pred_fallthru
          _
      $region20: #{tpu_custom_call.1} parent=5 // pred_fallthru
        _
      %p155 = scmp.le.s32.totalorder 1, %s15
      %p156 = scmp.lt.s32.totalorder %s15, 3
      %p157 = pnand %p155, %p156
      %p158 = pneg %p157
      // Predicated region
      $region25: #{tpu_custom_call.1} parent=5 // pred_check
        _
      $region26: #{tpu_custom_call.1} parent=5 // pred_check_branch
        %160 = sbr.rel (%p157) target = $region28
      $region27: #{tpu_custom_call.1} parent=5 // pred_region
        %s161 = ssub.s32 %s15, 1
        // Predicated region
        $region29: #{tpu_custom_call.1} parent=27 // pred_check
          %p162 = pneg %p48
        $region30: #{tpu_custom_call.1} parent=27 // pred_check_branch
          %164 = sbr.rel (%p162) target = $region32
        $region31: #{tpu_custom_call.1} parent=27 // pred_region
          %165 = dma.done [#allocation3], 128
        $region32: #{tpu_custom_call.1} parent=27 // pred_fallthru
          _
        %s166 = sand.u32 %s63, 1
        %s167 = scalar_lea.sflag [#allocation6], %s166
        %s168 = sand.u32 %s63, 1
        %s169 = smul.addr %s168, 24
        %s170 = scalar_lea.vmem [#allocation5], %s169
        // Predicated region
        $region33: #{tpu_custom_call.1} parent=27 // pred_check
          %p171 = pneg %p76
        $region34: #{tpu_custom_call.1} parent=27 // pred_check_branch
          %173 = sbr.rel (%p171) target = $region36
        $region35: #{tpu_custom_call.1} parent=27 // pred_region
          %174 = dma.done %s167, 384
        $region36: #{tpu_custom_call.1} parent=27 // pred_fallthru
          _
        %p175 = pneg %p48
        %p176 = pneg %p45
        %s177 = sand.u32 %s63, 1
        %s178 = scalar_lea.sflag [#allocation6], %s177
        %s179 = sand.u32 %s63, 1
        %s180 = smul.addr %s179, 24
        %s181 = scalar_lea.vmem [#allocation5], %s180
        %p182 = pneg %p76
        %p183 = pneg %p73
        %p184 = pneg %p104
        %p185 = pneg %p101
        %s186 = sand.u32 %s91, 1
        %s187 = scalar_lea.sflag [#allocation4], %s186
        %s188 = sand.u32 %s91, 1
        %s189 = smul.addr %s188, 24
        %s190 = scalar_lea.vmem [#allocation7], %s189
        %s191 = smul.u32 3, %s25
        %s192 = smul.u32 3, %s25
        %v193 = vld [vmem:[#allocation2] sm:$0xff]
        %v194 = vld [vmem:[%s170] sm:$0xff]
        %v195 = vld [vmem:[%s170 + $0x8] sm:$0xff]
        %v196 = vld [vmem:[%s170 + $0x10] sm:$0xff]
        %vm197 = vcmask 64512
        %v199 = vsel %vm197, %v193, 0
        %201 = vmatprep.subr.mxu0 %v195
        %202 = vmatpush1.msra.mxu0 %v194
        %203 = vmatprep.subr.mxu0 0.0
        %204 = vmatpush1.msra.mxu0 0.0
        %205 = vmatprep.subr.mxu0 0.0
        %206 = vmatpush1.msra.mxu0 0.0
        %207 = vmatprep.subr.mxu0 0.0
        %208 = vmatpush1.msra.mxu0 0.0
        %209 = vmatprep.subr.mxu0 0.0
        %210 = vmatpush1.msra.mxu0 0.0
        %211 = vmatprep.subr.mxu0 0.0
        %212 = vmatpush1.msra.mxu0 0.0
        %213 = vmatprep.subr.mxu0 0.0
        %214 = vmatpush1.msra.mxu0 0.0
        %215 = vmatprep.subr.mxu0 0.0
        %216 = vmatpush1.msra.mxu0 0.0
        %217 = vmatprep.subr.mxu0 0.0
        %218 = vmatpush1.msra.mxu0 0.0
        %219 = vmatprep.subr.mxu0 0.0
        %220 = vmatpush1.msra.mxu0 0.0
        %221 = vmatprep.subr.mxu0 0.0
        %222 = vmatpush1.msra.mxu0 0.0
        %223 = vmatprep.subr.mxu0 0.0
        %224 = vmatpush1.msra.mxu0 0.0
        %225 = vmatprep.subr.mxu0 0.0
        %226 = vmatpush1.msra.mxu0 0.0
        %227 = vmatprep.subr.mxu0 0.0
        %228 = vmatpush1.msra.mxu0 0.0
        %229 = vmatprep.subr.mxu0 0.0
        %230 = vmatpush1.msra.mxu0 0.0
        %231 = vmatprep.subr.mxu0 0.0
        %232 = vmatpush1.msra.mxu0 0.0
        %233 = vmatprep.subr.mxu0 0.0
        %234 = vmatpush1.msra.mxu0 0.0
        %235 = vmatprep.subr.mxu0 0.0
        %236 = vmatpush1.msra.mxu0 0.0
        %237 = vmatprep.subr.mxu0 0.0
        %238 = vmatpush1.msra.mxu0 0.0
        %239 = vmatprep.subr.mxu0 0.0
        %240 = vmatpush1.msra.mxu0 0.0
        %241 = vmatprep.subr.mxu0 0.0
        %242 = vmatpush1.msra.mxu0 0.0
        %243 = vmatprep.subr.mxu0 0.0
        %244 = vmatpush1.msra.mxu0 0.0
        %245 = vmatprep.subr.mxu0 0.0
        %246 = vmatpush1.msra.mxu0 0.0
        %247 = vmatprep.subr.mxu0 0.0
        %248 = vmatpush1.msra.mxu0 0.0
        %249 = vmatprep.subr.mxu0 0.0
        %250 = vmatpush1.msra.mxu0 0.0
        %251 = vmatprep.subr.mxu0 0.0
        %252 = vmatpush1.msra.mxu0 0.0
        %253 = vmatprep.subr.mxu0 0.0
        %254 = vmatpush1.msra.mxu0 0.0
        %255 = vmatprep.subr.mxu0 0.0
        %256 = vmatpush1.msra.mxu0 0.0
        %257 = vmatprep.subr.mxu0 0.0
        %258 = vmatpush1.msra.mxu0 0.0
        %259 = vmatprep.subr.mxu0 0.0
        %260 = vmatpush1.msra.mxu0 0.0
        %261 = vmatprep.subr.mxu0 0.0
        %262 = vmatpush1.msra.mxu0 0.0
        %263 = vmatprep.subr.mxu0 0.0
        %264 = vmatpush1.msra.mxu0 0.0
        %265 = vmatprep.mubr.f32.mxu0 0.0
        %266 = vmatmul.mubr.f32.gmra.mrb[0].mxu0 %v199
        %v267 = vpop.f32.mrb[0].mxu0
        %v268 = vadd.f32 0.0, %v267
        %v269 = vpop.f32.mrb[0].mxu0
        %v270 = vadd.f32 0.0, %v269
        %271 = vdwg.mxu0
        %272 = vmatprep.subr.mxu0 0.0
        %273 = vmatpush1.msra.mxu0 %v196
        %274 = vmatprep.subr.mxu0 0.0
        %275 = vmatpush1.msra.mxu0 0.0
        %276 = vmatprep.subr.mxu0 0.0
        %277 = vmatpush1.msra.mxu0 0.0
        %278 = vmatprep.subr.mxu0 0.0
        %279 = vmatpush1.msra.mxu0 0.0
        %280 = vmatprep.subr.mxu0 0.0
        %281 = vmatpush1.msra.mxu0 0.0
        %282 = vmatprep.subr.mxu0 0.0
        %283 = vmatpush1.msra.mxu0 0.0
        %284 = vmatprep.subr.mxu0 0.0
        %285 = vmatpush1.msra.mxu0 0.0
        %286 = vmatprep.subr.mxu0 0.0
        %287 = vmatpush1.msra.mxu0 0.0
        %288 = vmatprep.subr.mxu0 0.0
        %289 = vmatpush1.msra.mxu0 0.0
        %290 = vmatprep.subr.mxu0 0.0
        %291 = vmatpush1.msra.mxu0 0.0
        %292 = vmatprep.subr.mxu0 0.0
        %293 = vmatpush1.msra.mxu0 0.0
        %294 = vmatprep.subr.mxu0 0.0
        %295 = vmatpush1.msra.mxu0 0.0
        %296 = vmatprep.subr.mxu0 0.0
        %297 = vmatpush1.msra.mxu0 0.0
        %298 = vmatprep.subr.mxu0 0.0
        %299 = vmatpush1.msra.mxu0 0.0
        %300 = vmatprep.subr.mxu0 0.0
        %301 = vmatpush1.msra.mxu0 0.0
        %302 = vmatprep.subr.mxu0 0.0
        %303 = vmatpush1.msra.mxu0 0.0
        %304 = vmatprep.subr.mxu0 0.0
        %305 = vmatpush1.msra.mxu0 0.0
        %306 = vmatprep.subr.mxu0 0.0
        %307 = vmatpush1.msra.mxu0 0.0
        %308 = vmatprep.subr.mxu0 0.0
        %309 = vmatpush1.msra.mxu0 0.0
        %310 = vmatprep.subr.mxu0 0.0
        %311 = vmatpush1.msra.mxu0 0.0
        %312 = vmatprep.subr.mxu0 0.0
        %313 = vmatpush1.msra.mxu0 0.0
        %314 = vmatprep.subr.mxu0 0.0
        %315 = vmatpush1.msra.mxu0 0.0
        %316 = vmatprep.subr.mxu0 0.0
        %317 = vmatpush1.msra.mxu0 0.0
        %318 = vmatprep.subr.mxu0 0.0
        %319 = vmatpush1.msra.mxu0 0.0
        %320 = vmatprep.subr.mxu0 0.0
        %321 = vmatpush1.msra.mxu0 0.0
        %322 = vmatprep.subr.mxu0 0.0
        %323 = vmatpush1.msra.mxu0 0.0
        %324 = vmatprep.subr.mxu0 0.0
        %325 = vmatpush1.msra.mxu0 0.0
        %326 = vmatprep.subr.mxu0 0.0
        %327 = vmatpush1.msra.mxu0 0.0
        %328 = vmatprep.subr.mxu0 0.0
        %329 = vmatpush1.msra.mxu0 0.0
        %330 = vmatprep.subr.mxu0 0.0
        %331 = vmatpush1.msra.mxu0 0.0
        %332 = vmatprep.subr.mxu0 0.0
        %333 = vmatpush1.msra.mxu0 0.0
        %334 = vmatprep.subr.mxu0 0.0
        %335 = vmatpush1.msra.mxu0 0.0
        %336 = vmatprep.mubr.f32.mxu0 0.0
        %337 = vmatmul.mubr.f32.gmra.mrb[0].mxu0 %v199
        %v338 = vpop.f32.mrb[0].mxu0
        %v339 = vadd.f32 0.0, %v338
        %v340 = vpop.f32.mrb[0].mxu0
        %341 = vdwg.mxu0
        %v342 = vmul.f32 %v268, %v268
        %v343 = vmul.f32 %v270, %v270
        %v344 = vmul.f32 %v339, %v339
        %v345 = vmul.f32 %v342, %v268
        %v346 = vmul.f32 %v343, %v270
        %v347 = vmul.f32 %v344, %v339
        %v348 = vmul.f32 %v345, 0.044715
        %v349 = vmul.f32 %v346, 0.044715
        %v350 = vmul.f32 %v347, 0.044715
        %v351 = vadd.f32 %v268, %v348
        %v352 = vadd.f32 %v270, %v349
        %v353 = vadd.f32 %v339, %v350
        %v354 = vmul.f32 %v351, 0.7978846
        %v355 = vmul.f32 %v352, 0.7978846
        %v356 = vmul.f32 %v353, 0.7978846
        %v357 = vmul.f32 %v268, 0.5
        %v358 = vmul.f32 %v270, 0.5
        %v359 = vmul.f32 %v339, 0.5
        %v360 = vtanh.pop %v354
        %v361 = vtanh.pop %v355
        %v362 = vtanh.pop %v356
        %v363 = vadd.f32 %v360, 1.0
        %v364 = vadd.f32 %v361, 1.0
        %v365 = vadd.f32 %v362, 1.0
        %v366 = vmul.f32 %v357, %v363
        %v367 = vmul.f32 %v358, %v364
        %v368 = vmul.f32 %v359, %v365
        %369 = vst [vmem:[%s190] sm:$0xff] %v366
        %370 = vst [vmem:[%s190 + $0x8] sm:$0xff] %v367
        %vm371 = vcmask 556032
        %372 = vst.msk [vmem:[%s190 + $0x10] sm:$0xff] %vm371, %v368
        %s373 = sand.u32 %s91, 1
        %s374 = scalar_lea.sflag [#allocation4], %s373
        %s375 = sand.u32 %s91, 1
        %s376 = smul.addr %s375, 24
        %s377 = scalar_lea.vmem [#allocation7], %s376
        // Predicated region
        $region37: #{tpu_custom_call.1} parent=27 // pred_check
          %p378 = pneg %p101
        $region38: #{tpu_custom_call.1} parent=27 // pred_check_branch
          %380 = sbr.rel (%p378) target = $region40
        $region39: #{tpu_custom_call.1} parent=27 // pred_region
          %s381 = smul.u32 3, %s25
          %s383 = ssub.s32 384, 384
          %384 = vsyncadd %s374, %s383
          %s385 = smul.addr %s24, 3
          %s386 = sadd.s32 %s381, %s385
          %s387 = smul.addr %s386, 128
          %s388 = scalar_lea.hbm %s2, %s387
          %s390 = sshll.u32 %s377, 4
          %s391 = int_to_ptr.vmem [resolvable:$true] %s390
          %393 = dma.vmem_to_hbm [thread:$0]  %s391, 384, %s388, %s374
        $region40: #{tpu_custom_call.1} parent=27 // pred_fallthru
          _
      $region28: #{tpu_custom_call.1} parent=5 // pred_fallthru
        _
      %p394 = scmp.le.s32.totalorder 2, %s15
      // Predicated region
      $region41: #{tpu_custom_call.1} parent=5 // pred_check
        %p395 = pneg %p394
      $region42: #{tpu_custom_call.1} parent=5 // pred_check_branch
        %397 = sbr.rel (%p395) target = $region44
      $region43: #{tpu_custom_call.1} parent=5 // pred_region
        %s398 = ssub.s32 %s15, 2
        // Predicated region
        $region45: #{tpu_custom_call.1} parent=43 // pred_check
          %p399 = pneg %p107
        $region46: #{tpu_custom_call.1} parent=43 // pred_check_branch
          %401 = sbr.rel (%p399) target = $region48
        $region47: #{tpu_custom_call.1} parent=43 // pred_region
          %s402 = sand.u32 %s92, 1
          %s403 = scalar_lea.sflag [#allocation4], %s402
          %s404 = sand.u32 %s92, 1
          %s405 = smul.addr %s404, 24
          %s406 = scalar_lea.vmem [#allocation7], %s405
          %407 = dma.done %s403, 384
        $region48: #{tpu_custom_call.1} parent=43 // pred_fallthru
          _
      $region44: #{tpu_custom_call.1} parent=5 // pred_fallthru
        _
    $region6: #{tpu_custom_call.1} parent=1 // loop_footer
      %s19 = sadd.s32 1, %s15
    $region7: #{tpu_custom_call.1} parent=1 // loop_footer_branch
      %14 = sbr.rel target = $region3
    $region8: #{tpu_custom_call.1} parent=1 // loop_exit
      _
    %408 = vsyncpa [#allocation3], 1
    %s409 = scalar_lea.sflag [#allocation3], 1
    %410 = vsyncpa %s409, 1
    %411 = vsyncpa [#allocation6], 1
    %s412 = scalar_lea.sflag [#allocation6], 1
    %413 = vsyncpa %s412, 1
    %414 = vsyncpa [#allocation4], 1
    %s415 = scalar_lea.sflag [#allocation4], 1
    %416 = vsyncpa %s415, 1

</llo_original>
